<compile_context>
chip_gen: v7x
topology: tpu7x:2x2x1
jax: 0.10.0
libtpu: 0.0.40
codegen_flags: <defaults>
</compile_context>

<pallas_src>
import jax
import jax.numpy as jnp
from jax import lax
from jax.experimental import pallas as pl
from jax.experimental.pallas import tpu as pltpu


def _longitude_kernel(x_ref, o_ref):
    # x_ref: (Bn, C, T, V) in VMEM; o_ref: (Bn, T, V)
    x = x_ref[...]                                       # (Bn, C, T, V)

    # forward(): subtract joint-1 coordinates from every joint (kept for
    # fidelity; it cancels in the differences below).
    xc = x - x[:, :, :, 1:2]                             # (Bn, C, T, V)

    # longitude(): hip vector (joint 16 - joint 12)
    hip = xc[:, :, :, 16:17] - xc[:, :, :, 12:13]        # (Bn, C, T, 1)
    # vec[v] = x[v] - x[16]; column 16 (zero vector) is fixed up afterwards.
    vec = xc - xc[:, :, :, 16:17]                        # (Bn, C, T, V)

    # cos(angle) = <hip, vec> / (|hip| |vec|) = dot * rsqrt(hip_sq * vec_sq)
    dot = jnp.sum(hip * vec, axis=1)                     # (Bn, T, V)
    hip_sq = jnp.sum(hip * hip, axis=1)                  # (Bn, T, 1)
    vec_sq = jnp.sum(vec * vec, axis=1)                  # (Bn, T, V)
    angle = dot * lax.rsqrt(hip_sq * vec_sq)             # (Bn, T, V)

    # Column 16: reference sets vec[16] = hip before normalization, so the
    # cosine is 1 when hip != 0 and NaN (-> 0) when hip == 0.
    ang16 = hip_sq * lax.rsqrt(hip_sq * hip_sq)          # (Bn, T, 1): 1 or NaN
    col = lax.broadcasted_iota(jnp.int32, angle.shape, 2)
    angle = jnp.where(col == 16, ang16, angle)

    # nan_to_num(nan=0.0): zero-length hip/vec gives 0 * inf = NaN here.
    angle = jnp.where(jnp.isnan(angle), jnp.zeros_like(angle), angle)
    # where(angle < 0, angle + 1, angle)
    angle = jnp.where(angle < 0, angle + 1.0, angle)

    o_ref[...] = angle.astype(o_ref.dtype)


def symmetry_module_forward(x, *, block_n=None, vmem_budget_bytes=8 * (1 << 20)):
    """x: (N, C, T, V) float32 -> (N, T, V) float32."""
    N, C, T, V = x.shape
    itemsize = jnp.dtype(x.dtype).itemsize

    if block_n is None:
        # Padded per-sample VMEM footprint: input (C,T,V) + output (T,V),
        # with V padded to 128 lanes and T to a multiple of 8 sublanes.
        v_pad = pl.cdiv(V, 128) * 128
        t_pad = pl.cdiv(T, 8) * 8
        per_sample = (C + 1) * t_pad * v_pad * itemsize
        # BlockSpec double-buffers each tile -> 2x.
        block_n = max(1, vmem_budget_bytes // (2 * per_sample))
    block_n = int(min(block_n, N))
    # Snap to the largest divisor of N <= cap so blocks tile N exactly.
    while N % block_n:
        block_n -= 1

    grid = (N // block_n,)
    return pl.pallas_call(
        _longitude_kernel,
        out_shape=jax.ShapeDtypeStruct((N, T, V), x.dtype),
        grid=grid,
        in_specs=[pl.BlockSpec((block_n, C, T, V), lambda n: (n, 0, 0, 0))],
        out_specs=pl.BlockSpec((block_n, T, V), lambda n: (n, 0, 0)),
        compiler_params=pltpu.CompilerParams(
            dimension_semantics=("parallel",)),
    )(x)


def _reference(x):
    # Pure-JAX reference mirroring the PyTorch module (normalize-then-dot).
    xc = x - x[:, :, :, 1:2]
    hip = xc[:, :, :, 16] - xc[:, :, :, 12]                       # (N, C, T)
    nhip = hip / jnp.linalg.norm(hip, axis=1, keepdims=True)      # (N, C, T)
    vec = xc - xc[:, :, :, 16:17]                                  # (N, C, T, V)
    vec = vec.at[:, :, :, 16].set(hip)
    nvec = vec / jnp.linalg.norm(vec, axis=1, keepdims=True)
    angle = jnp.einsum("nct,nctv->ntv", nhip, nvec)
    angle = jnp.where(jnp.isnan(angle), 0.0, angle)
    angle = jnp.where(angle < 0, angle + 1.0, angle)
    return angle


if __name__ == "__main__":
    # Small shapes consistent with the module: C=3 coords, V=25 joints
    # (NTU skeleton; indices 1, 12, 16 are used), a few frames / samples.
    key = jax.random.PRNGKey(0)
    N, C, T, V = 4, 3, 8, 25
    x = jax.random.normal(key, (N, C, T, V), dtype=jnp.float32)

    out = symmetry_module_forward(x)
    out = jax.block_until_ready(out)

    ref = _reference(x)
    assert out.shape == (N, T, V)
    assert jnp.allclose(out, ref, atol=1e-5, rtol=1e-5), "mismatch vs reference"

    print("KERNEL_OK")
</pallas_src>

<mosaic_0001>
module attributes {stable_mosaic.version = 11 : i64} {
  func.func @_longitude_kernel(%arg0: i32, %arg1: memref<4x3x8x25xf32, #tpu.memory_space<vmem>>, %arg2: memref<4x8x25xf32, #tpu.memory_space<vmem>>) attributes {dimension_semantics = [#tpu.dimension_semantics<parallel>], iteration_bounds = array<i64: 1>, scalar_prefetch = 0 : i64, scratch_operands = 0 : i64, tpu.core_type = #tpu.core_type<tc>, window_params = [{transform_indices = @transform_0, window_bounds = array<i64: 4, 3, 8, 25>}, {transform_indices = @transform_1, window_bounds = array<i64: 4, 8, 25>}]} {
    %c0 = arith.constant 0 : index
    %c0_0 = arith.constant 0 : index
    %c0_1 = arith.constant 0 : index
    %c0_2 = arith.constant 0 : index
    %0 = vector.load %arg1[%c0, %c0_0, %c0_1, %c0_2] : memref<4x3x8x25xf32, #tpu.memory_space<vmem>>, vector<4x3x8x25xf32>
    %1 = vector.extract_strided_slice %0 {offsets = [0, 0, 0, 1], sizes = [4, 3, 8, 1], strides = [1, 1, 1, 1]} : vector<4x3x8x25xf32> to vector<4x3x8x1xf32>
    %2 = vector.broadcast %1 : vector<4x3x8x1xf32> to vector<4x3x8x25xf32>
    %3 = arith.subf %0, %2 : vector<4x3x8x25xf32>
    %4 = vector.extract_strided_slice %3 {offsets = [0, 0, 0, 16], sizes = [4, 3, 8, 1], strides = [1, 1, 1, 1]} : vector<4x3x8x25xf32> to vector<4x3x8x1xf32>
    %5 = vector.extract_strided_slice %3 {offsets = [0, 0, 0, 12], sizes = [4, 3, 8, 1], strides = [1, 1, 1, 1]} : vector<4x3x8x25xf32> to vector<4x3x8x1xf32>
    %6 = arith.subf %4, %5 : vector<4x3x8x1xf32>
    %7 = vector.extract_strided_slice %3 {offsets = [0, 0, 0, 16], sizes = [4, 3, 8, 1], strides = [1, 1, 1, 1]} : vector<4x3x8x25xf32> to vector<4x3x8x1xf32>
    %8 = vector.broadcast %7 : vector<4x3x8x1xf32> to vector<4x3x8x25xf32>
    %9 = arith.subf %3, %8 : vector<4x3x8x25xf32>
    %10 = vector.broadcast %6 : vector<4x3x8x1xf32> to vector<4x3x8x25xf32>
    %11 = arith.mulf %10, %9 : vector<4x3x8x25xf32>
    %cst = arith.constant dense<0.000000e+00> : vector<4x8x25xf32>
    %12 = vector.multi_reduction <add>, %11, %cst [1] : vector<4x3x8x25xf32> to vector<4x8x25xf32>
    %13 = arith.mulf %6, %6 : vector<4x3x8x1xf32>
    %cst_3 = arith.constant dense<0.000000e+00> : vector<4x8x1xf32>
    %14 = vector.multi_reduction <add>, %13, %cst_3 [1] : vector<4x3x8x1xf32> to vector<4x8x1xf32>
    %15 = arith.mulf %9, %9 : vector<4x3x8x25xf32>
    %cst_4 = arith.constant dense<0.000000e+00> : vector<4x8x25xf32>
    %16 = vector.multi_reduction <add>, %15, %cst_4 [1] : vector<4x3x8x25xf32> to vector<4x8x25xf32>
    %17 = vector.broadcast %14 : vector<4x8x1xf32> to vector<4x8x25xf32>
    %18 = arith.mulf %17, %16 : vector<4x8x25xf32>
    %19 = math.rsqrt %18 : vector<4x8x25xf32>
    %20 = arith.mulf %12, %19 : vector<4x8x25xf32>
    %21 = arith.mulf %14, %14 : vector<4x8x1xf32>
    %22 = math.rsqrt %21 : vector<4x8x1xf32>
    %23 = arith.mulf %14, %22 : vector<4x8x1xf32>
    %24 = tpu.iota {dimensions = array<i32: 2>} : vector<4x8x25xi32>
    %c16_i32 = arith.constant 16 : i32
    %25 = vector.broadcast %c16_i32 : i32 to vector<4x8x25xi32>
    %26 = arith.cmpi eq, %24, %25 : vector<4x8x25xi32>
    %27 = vector.shape_cast %23 : vector<4x8x1xf32> to vector<4x8x1xf32>
    %28 = vector.broadcast %27 : vector<4x8x1xf32> to vector<4x8x25xf32>
    %29 = arith.select %26, %28, %20 : vector<4x8x25xi1>, vector<4x8x25xf32>
    %30 = arith.cmpf one, %29, %29 : vector<4x8x25xf32>
    %cst_5 = arith.constant 0.000000e+00 : f32
    %31 = vector.broadcast %cst_5 : f32 to vector<4x8x25xf32>
    %32 = arith.select %30, %31, %29 : vector<4x8x25xi1>, vector<4x8x25xf32>
    %cst_6 = arith.constant 0.000000e+00 : f32
    %33 = vector.broadcast %cst_6 : f32 to vector<4x8x25xf32>
    %34 = arith.cmpf olt, %32, %33 : vector<4x8x25xf32>
    %cst_7 = arith.constant 1.000000e+00 : f32
    %35 = vector.broadcast %cst_7 : f32 to vector<4x8x25xf32>
    %36 = arith.addf %32, %35 : vector<4x8x25xf32>
    %37 = arith.select %34, %36, %32 : vector<4x8x25xi1>, vector<4x8x25xf32>
    %c0_8 = arith.constant 0 : index
    %c0_9 = arith.constant 0 : index
    %c0_10 = arith.constant 0 : index
    %38 = vector.load %arg2[%c0_8, %c0_9, %c0_10] : memref<4x8x25xf32, #tpu.memory_space<vmem>>, vector<4x8x25xf32>
    tpu.vector_store %arg2[%c0_8, %c0_9, %c0_10], %37 {strides = array<i32>} : memref<4x8x25xf32, #tpu.memory_space<vmem>>, vector<4x8x25xf32>,
    return
  }
  func.func @transform_0(%arg0: i32) -> (i32, i32, i32, i32) {
    %c0_i32 = arith.constant 0 : i32
    %c0_i32_0 = arith.constant 0 : i32
    %c0_i32_1 = arith.constant 0 : i32
    %c0_i32_2 = arith.constant 0 : i32
    return %arg0, %c0_i32, %c0_i32_0, %c0_i32_1 : i32, i32, i32, i32
  }
  func.func @transform_1(%arg0: i32) -> (i32, i32, i32) {
    %c0_i32 = arith.constant 0 : i32
    %c0_i32_0 = arith.constant 0 : i32
    %c0_i32_1 = arith.constant 0 : i32
    return %arg0, %c0_i32, %c0_i32_0 : i32, i32, i32
  }
}

</mosaic_0001>

<llo_original>
// kernel: tpu_custom_call.1
$region0: #{tpu_custom_call.1}
  #allocation0 [shape = 'u32[]', space=smem, size = 0x4, offset = 0x4, fixed_abs, tag = 'smem constant byte address 0x4 - core index']
  #allocation1 [shape = 'u32[144,128]{1,0:T(1,128)}', space=vmem, size = 0x12000, scoped, tag = 'internal scratch']
  %s0 = inlined_call_operand.hbm [shape: f32[4,3,8,25], index: 0, kind: input, shape index: {}]
  %s1 = inlined_call_operand.hbm [shape: f32[4,8,25], index: 1, kind: output, shape index: {}]
  %s2 = sld [smem:[#allocation0]]
  $region18: #{tpu_custom_call.1} parent=0
    _
  %s4 = ssub.s32 1, %s2
  %s5 = scalar_select 0, %s4, %s2
  $region1: #{tpu_custom_call.1} parent=0
    #allocation2 [shape = 'u8[49152]{0}', space=vmem, size = 0xc000, scoped, tag = 'input window, operand 0, single buffered']
    #allocation3 [shape = 's32[1]{0}', space=sflag, size = 0x4, scoped, tag = 'scoped memory for tpu_custom_call.1']
    #allocation4 [shape = 's32[1]{0}', space=sflag, size = 0x4, scoped, tag = 'scoped memory for tpu_custom_call.1']
    #allocation5 [shape = 'u8[16384]{0}', space=vmem, size = 0x4000, scoped, tag = 'output window, operand 0, single buffered']
    %6 = vsyncpa [#allocation3], 0
    %7 = vsyncpa [#allocation4], 0
    // Predicated region
    $region2: #{tpu_custom_call.1} parent=1 // pred_check
      _
    $region3: #{tpu_custom_call.1} parent=1 // pred_check_branch
      %9 = sbr.rel (0) target = $region5
    $region4: #{tpu_custom_call.1} parent=1 // pred_region
      %s11 = ssub.s32 1536, 1536
      %12 = vsyncadd [#allocation3], %s11
      %s13 = sshll.u32 [#allocation2], 4
      %s14 = int_to_ptr.vmem [resolvable:$true] %s13
      %19 = dma.hbm_to_vmem [thread:$0]  %s0, 1536, %s14, [#allocation3], 128, 128, 8
    $region5: #{tpu_custom_call.1} parent=1 // pred_fallthru
      _
    // Predicated region
    $region6: #{tpu_custom_call.1} parent=1 // pred_check
      _
    $region7: #{tpu_custom_call.1} parent=1 // pred_check_branch
      %21 = sbr.rel (0) target = $region9
    $region8: #{tpu_custom_call.1} parent=1 // pred_region
      %22 = dma.done [#allocation3], 1536
    $region9: #{tpu_custom_call.1} parent=1 // pred_fallthru
      _
    %v23 = vld [vmem:[#allocation2] sm:$0xff]
    %v24 = vld [vmem:[#allocation2 + $0x8] sm:$0xff]
    %v25 = vld [vmem:[#allocation2 + $0x10] sm:$0xff]
    %v26 = vld [vmem:[#allocation2 + $0x18] sm:$0xff]
    %v27 = vld [vmem:[#allocation2 + $0x20] sm:$0xff]
    %v28 = vld [vmem:[#allocation2 + $0x28] sm:$0xff]
    %v29 = vld [vmem:[#allocation2 + $0x30] sm:$0xff]
    %v30 = vld [vmem:[#allocation2 + $0x38] sm:$0xff]
    %v31 = vld [vmem:[#allocation2 + $0x40] sm:$0xff]
    %v32 = vld [vmem:[#allocation2 + $0x48] sm:$0xff]
    %v33 = vld [vmem:[#allocation2 + $0x50] sm:$0xff]
    %v34 = vld [vmem:[#allocation2 + $0x58] sm:$0xff]
    %36 = vset.pattern.permute.xlu0 1
    %37 = vperm.xlu0 %36, %v23
    %v38 = vpop.permute.xlu0 %37
    %41 = vset.pattern.permute.xlu0 1
    %42 = vperm.xlu0 %41, %v24
    %v43 = vpop.permute.xlu0 %42
    %46 = vset.pattern.permute.xlu0 1
    %47 = vperm.xlu0 %46, %v25
    %v48 = vpop.permute.xlu0 %47
    %51 = vset.pattern.permute.xlu0 1
    %52 = vperm.xlu0 %51, %v26
    %v53 = vpop.permute.xlu0 %52
    %56 = vset.pattern.permute.xlu0 1
    %57 = vperm.xlu0 %56, %v27
    %v58 = vpop.permute.xlu0 %57
    %61 = vset.pattern.permute.xlu0 1
    %62 = vperm.xlu0 %61, %v28
    %v63 = vpop.permute.xlu0 %62
    %66 = vset.pattern.permute.xlu0 1
    %67 = vperm.xlu0 %66, %v29
    %v68 = vpop.permute.xlu0 %67
    %71 = vset.pattern.permute.xlu0 1
    %72 = vperm.xlu0 %71, %v30
    %v73 = vpop.permute.xlu0 %72
    %76 = vset.pattern.permute.xlu0 1
    %77 = vperm.xlu0 %76, %v31
    %v78 = vpop.permute.xlu0 %77
    %81 = vset.pattern.permute.xlu0 1
    %82 = vperm.xlu0 %81, %v32
    %v83 = vpop.permute.xlu0 %82
    %86 = vset.pattern.permute.xlu0 1
    %87 = vperm.xlu0 %86, %v33
    %v88 = vpop.permute.xlu0 %87
    %91 = vset.pattern.permute.xlu0 1
    %92 = vperm.xlu0 %91, %v34
    %v93 = vpop.permute.xlu0 %92
    %v95 = vsub.f32 %v23, %v38
    %v96 = vsub.f32 %v24, %v43
    %v97 = vsub.f32 %v25, %v48
    %v98 = vsub.f32 %v26, %v53
    %v99 = vsub.f32 %v27, %v58
    %v100 = vsub.f32 %v28, %v63
    %v101 = vsub.f32 %v29, %v68
    %v102 = vsub.f32 %v30, %v73
    %v103 = vsub.f32 %v31, %v78
    %v104 = vsub.f32 %v32, %v83
    %v105 = vsub.f32 %v33, %v88
    %v106 = vsub.f32 %v34, %v93
    %119 = vrot.lane.b32.xlu0 %v95, 4
    %v120 = vpop.permute.xlu0 %119
    %121 = vrot.lane.b32.xlu0 %v96, 4
    %v122 = vpop.permute.xlu0 %121
    %123 = vrot.lane.b32.xlu0 %v97, 4
    %v124 = vpop.permute.xlu0 %123
    %125 = vrot.lane.b32.xlu0 %v98, 4
    %v126 = vpop.permute.xlu0 %125
    %127 = vrot.lane.b32.xlu0 %v99, 4
    %v128 = vpop.permute.xlu0 %127
    %129 = vrot.lane.b32.xlu0 %v100, 4
    %v130 = vpop.permute.xlu0 %129
    %131 = vrot.lane.b32.xlu0 %v101, 4
    %v132 = vpop.permute.xlu0 %131
    %133 = vrot.lane.b32.xlu0 %v102, 4
    %v134 = vpop.permute.xlu0 %133
    %135 = vrot.lane.b32.xlu0 %v103, 4
    %v136 = vpop.permute.xlu0 %135
    %137 = vrot.lane.b32.xlu0 %v104, 4
    %v138 = vpop.permute.xlu0 %137
    %139 = vrot.lane.b32.xlu0 %v105, 4
    %v140 = vpop.permute.xlu0 %139
    %141 = vrot.lane.b32.xlu0 %v106, 4
    %v142 = vpop.permute.xlu0 %141
    %v155 = vsub.f32 %v95, %v120
    %v156 = vsub.f32 %v96, %v122
    %v157 = vsub.f32 %v97, %v124
    %v158 = vsub.f32 %v98, %v126
    %v159 = vsub.f32 %v99, %v128
    %v160 = vsub.f32 %v100, %v130
    %v161 = vsub.f32 %v101, %v132
    %v162 = vsub.f32 %v102, %v134
    %v163 = vsub.f32 %v103, %v136
    %v164 = vsub.f32 %v104, %v138
    %v165 = vsub.f32 %v105, %v140
    %v166 = vsub.f32 %v106, %v142
    %167 = vset.pattern.permute.xlu0 16
    %168 = vperm.xlu0 %167, %v95
    %v169 = vpop.permute.xlu0 %168
    %171 = vset.pattern.permute.xlu0 16
    %172 = vperm.xlu0 %171, %v96
    %v173 = vpop.permute.xlu0 %172
    %175 = vset.pattern.permute.xlu0 16
    %176 = vperm.xlu0 %175, %v97
    %v177 = vpop.permute.xlu0 %176
    %179 = vset.pattern.permute.xlu0 16
    %180 = vperm.xlu0 %179, %v98
    %v181 = vpop.permute.xlu0 %180
    %183 = vset.pattern.permute.xlu0 16
    %184 = vperm.xlu0 %183, %v99
    %v185 = vpop.permute.xlu0 %184
    %187 = vset.pattern.permute.xlu0 16
    %188 = vperm.xlu0 %187, %v100
    %v189 = vpop.permute.xlu0 %188
    %191 = vset.pattern.permute.xlu0 16
    %192 = vperm.xlu0 %191, %v101
    %v193 = vpop.permute.xlu0 %192
    %195 = vset.pattern.permute.xlu0 16
    %196 = vperm.xlu0 %195, %v102
    %v197 = vpop.permute.xlu0 %196
    %199 = vset.pattern.permute.xlu0 16
    %200 = vperm.xlu0 %199, %v103
    %v201 = vpop.permute.xlu0 %200
    %203 = vset.pattern.permute.xlu0 16
    %204 = vperm.xlu0 %203, %v104
    %v205 = vpop.permute.xlu0 %204
    %207 = vset.pattern.permute.xlu0 16
    %208 = vperm.xlu0 %207, %v105
    %v209 = vpop.permute.xlu0 %208
    %211 = vset.pattern.permute.xlu0 16
    %212 = vperm.xlu0 %211, %v106
    %v213 = vpop.permute.xlu0 %212
    %v215 = vsub.f32 %v95, %v169
    %v216 = vsub.f32 %v96, %v173
    %v217 = vsub.f32 %v97, %v177
    %v218 = vsub.f32 %v98, %v181
    %v219 = vsub.f32 %v99, %v185
    %v220 = vsub.f32 %v100, %v189
    %v221 = vsub.f32 %v101, %v193
    %v222 = vsub.f32 %v102, %v197
    %v223 = vsub.f32 %v103, %v201
    %v224 = vsub.f32 %v104, %v205
    %v225 = vsub.f32 %v105, %v209
    %v226 = vsub.f32 %v106, %v213
    %228 = vset.pattern.permute.xlu0 16
    %229 = vperm.xlu0 %228, %v155
    %v230 = vpop.permute.xlu0 %229
    %233 = vset.pattern.permute.xlu0 16
    %234 = vperm.xlu0 %233, %v156
    %v235 = vpop.permute.xlu0 %234
    %238 = vset.pattern.permute.xlu0 16
    %239 = vperm.xlu0 %238, %v157
    %v240 = vpop.permute.xlu0 %239
    %243 = vset.pattern.permute.xlu0 16
    %244 = vperm.xlu0 %243, %v158
    %v245 = vpop.permute.xlu0 %244
    %248 = vset.pattern.permute.xlu0 16
    %249 = vperm.xlu0 %248, %v159
    %v250 = vpop.permute.xlu0 %249
    %253 = vset.pattern.permute.xlu0 16
    %254 = vperm.xlu0 %253, %v160
    %v255 = vpop.permute.xlu0 %254
    %258 = vset.pattern.permute.xlu0 16
    %259 = vperm.xlu0 %258, %v161
    %v260 = vpop.permute.xlu0 %259
    %263 = vset.pattern.permute.xlu0 16
    %264 = vperm.xlu0 %263, %v162
    %v265 = vpop.permute.xlu0 %264
    %268 = vset.pattern.permute.xlu0 16
    %269 = vperm.xlu0 %268, %v163
    %v270 = vpop.permute.xlu0 %269
    %273 = vset.pattern.permute.xlu0 16
    %274 = vperm.xlu0 %273, %v164
    %v275 = vpop.permute.xlu0 %274
    %278 = vset.pattern.permute.xlu0 16
    %279 = vperm.xlu0 %278, %v165
    %v280 = vpop.permute.xlu0 %279
    %283 = vset.pattern.permute.xlu0 16
    %284 = vperm.xlu0 %283, %v166
    %v285 = vpop.permute.xlu0 %284
    %v287 = vmul.f32 %v230, %v215
    %v288 = vmul.f32 %v235, %v216
    %v289 = vmul.f32 %v240, %v217
    %v290 = vmul.f32 %v245, %v218
    %v291 = vmul.f32 %v250, %v219
    %v292 = vmul.f32 %v255, %v220
    %v293 = vmul.f32 %v260, %v221
    %v294 = vmul.f32 %v265, %v222
    %v295 = vmul.f32 %v270, %v223
    %v296 = vmul.f32 %v275, %v224
    %v297 = vmul.f32 %v280, %v225
    %v298 = vmul.f32 %v285, %v226
    %vm299 = vcmask 203776
    %v300 = vsel %vm299, %v287, 0.0
    %v301 = vsel %vm299, %v288, 0.0
    %v302 = vadd.f32 %v300, %v301
    %v303 = vsel %vm299, %v289, 0.0
    %v304 = vadd.f32 %v302, %v303
    %v305 = vsel %vm299, %v290, 0.0
    %v306 = vsel %vm299, %v291, 0.0
    %v307 = vadd.f32 %v305, %v306
    %v308 = vsel %vm299, %v292, 0.0
    %v309 = vadd.f32 %v307, %v308
    %v310 = vsel %vm299, %v293, 0.0
    %v311 = vsel %vm299, %v294, 0.0
    %v312 = vadd.f32 %v310, %v311
    %v313 = vsel %vm299, %v295, 0.0
    %v314 = vadd.f32 %v312, %v313
    %v315 = vsel %vm299, %v296, 0.0
    %v316 = vsel %vm299, %v297, 0.0
    %v317 = vadd.f32 %v315, %v316
    %v318 = vsel %vm299, %v298, 0.0
    %v319 = vadd.f32 %v317, %v318
    %v320 = vmul.f32 %v155, %v155
    %v321 = vmul.f32 %v156, %v156
    %v322 = vmul.f32 %v157, %v157
    %v323 = vmul.f32 %v158, %v158
    %v324 = vmul.f32 %v159, %v159
    %v325 = vmul.f32 %v160, %v160
    %v326 = vmul.f32 %v161, %v161
    %v327 = vmul.f32 %v162, %v162
    %v328 = vmul.f32 %v163, %v163
    %v329 = vmul.f32 %v164, %v164
    %v330 = vmul.f32 %v165, %v165
    %v331 = vmul.f32 %v166, %v166
    %vm332 = vcmask 138368
    %v333 = vsel %vm332, %v320, 0.0
    %v334 = vsel %vm332, %v321, 0.0
    %v335 = vadd.f32 %v333, %v334
    %v336 = vsel %vm332, %v322, 0.0
    %v337 = vadd.f32 %v335, %v336
    %v338 = vsel %vm332, %v323, 0.0
    %v339 = vsel %vm332, %v324, 0.0
    %v340 = vadd.f32 %v338, %v339
    %v341 = vsel %vm332, %v325, 0.0
    %v342 = vadd.f32 %v340, %v341
    %v343 = vsel %vm332, %v326, 0.0
    %v344 = vsel %vm332, %v327, 0.0
    %v345 = vadd.f32 %v343, %v344
    %v346 = vsel %vm332, %v328, 0.0
    %v347 = vadd.f32 %v345, %v346
    %v348 = vsel %vm332, %v329, 0.0
    %v349 = vsel %vm332, %v330, 0.0
    %v350 = vadd.f32 %v348, %v349
    %v351 = vsel %vm332, %v331, 0.0
    %v352 = vadd.f32 %v350, %v351
    %v353 = vmul.f32 %v215, %v215
    %v354 = vmul.f32 %v216, %v216
    %v355 = vmul.f32 %v217, %v217
    %v356 = vmul.f32 %v218, %v218
    %v357 = vmul.f32 %v219, %v219
    %v358 = vmul.f32 %v220, %v220
    %v359 = vmul.f32 %v221, %v221
    %v360 = vmul.f32 %v222, %v222
    %v361 = vmul.f32 %v223, %v223
    %v362 = vmul.f32 %v224, %v224
    %v363 = vmul.f32 %v225, %v225
    %v364 = vmul.f32 %v226, %v226
    %v365 = vsel %vm299, %v353, 0.0
    %v366 = vsel %vm299, %v354, 0.0
    %v367 = vadd.f32 %v365, %v366
    %v368 = vsel %vm299, %v355, 0.0
    %v369 = vadd.f32 %v367, %v368
    %v370 = vsel %vm299, %v356, 0.0
    %v371 = vsel %vm299, %v357, 0.0
    %v372 = vadd.f32 %v370, %v371
    %v373 = vsel %vm299, %v358, 0.0
    %v374 = vadd.f32 %v372, %v373
    %v375 = vsel %vm299, %v359, 0.0
    %v376 = vsel %vm299, %v360, 0.0
    %v377 = vadd.f32 %v375, %v376
    %v378 = vsel %vm299, %v361, 0.0
    %v379 = vadd.f32 %v377, %v378
    %v380 = vsel %vm299, %v362, 0.0
    %v381 = vsel %vm299, %v363, 0.0
    %v382 = vadd.f32 %v380, %v381
    %v383 = vsel %vm299, %v364, 0.0
    %v384 = vadd.f32 %v382, %v383
    %386 = vset.pattern.permute.xlu0 16
    %387 = vperm.xlu0 %386, %v337
    %v388 = vpop.permute.xlu0 %387
    %391 = vset.pattern.permute.xlu0 16
    %392 = vperm.xlu0 %391, %v342
    %v393 = vpop.permute.xlu0 %392
    %396 = vset.pattern.permute.xlu0 16
    %397 = vperm.xlu0 %396, %v347
    %v398 = vpop.permute.xlu0 %397
    %401 = vset.pattern.permute.xlu0 16
    %402 = vperm.xlu0 %401, %v352
    %v403 = vpop.permute.xlu0 %402
    %v405 = vmul.f32 %v388, %v369
    %v406 = vmul.f32 %v393, %v374
    %v407 = vmul.f32 %v398, %v379
    %v408 = vmul.f32 %v403, %v384
    %v409 = vrsqrt.pop %v405
    %v410 = vrsqrt.pop %v406
    %v411 = vrsqrt.pop %v407
    %v412 = vrsqrt.pop %v408
    %v413 = vmul.f32 %v304, %v409
    %v414 = vmul.f32 %v309, %v410
    %v415 = vmul.f32 %v314, %v411
    %v416 = vmul.f32 %v319, %v412
    %v417 = vmul.f32 %v337, %v337
    %v418 = vmul.f32 %v342, %v342
    %v419 = vmul.f32 %v347, %v347
    %v420 = vmul.f32 %v352, %v352
    %v421 = vrsqrt.pop %v417
    %v422 = vrsqrt.pop %v418
    %v423 = vrsqrt.pop %v419
    %v424 = vrsqrt.pop %v420
    %v425 = vmul.f32 %v337, %v421
    %v426 = vmul.f32 %v342, %v422
    %v427 = vmul.f32 %v347, %v423
    %v428 = vmul.f32 %v352, %v424
    %v429 = vlaneseq
    %v430 = vand.u32 %v429, 127
    %vm431 = vcmp.eq.s32.totalorder %v430, 16
    %433 = vset.pattern.permute.xlu0 16
    %434 = vperm.xlu0 %433, %v425
    %v435 = vpop.permute.xlu0 %434
    %438 = vset.pattern.permute.xlu0 16
    %439 = vperm.xlu0 %438, %v426
    %v440 = vpop.permute.xlu0 %439
    %443 = vset.pattern.permute.xlu0 16
    %444 = vperm.xlu0 %443, %v427
    %v445 = vpop.permute.xlu0 %444
    %448 = vset.pattern.permute.xlu0 16
    %449 = vperm.xlu0 %448, %v428
    %v450 = vpop.permute.xlu0 %449
    %v452 = vsel %vm431, %v435, %v413
    %v453 = vsel %vm431, %v440, %v414
    %v454 = vsel %vm431, %v445, %v415
    %v455 = vsel %vm431, %v450, %v416
    %vm456 = vcmp.ne.f32.partialorder %v452, %v452
    %vm457 = vcmp.ne.f32.partialorder %v453, %v453
    %vm458 = vcmp.ne.f32.partialorder %v454, %v454
    %vm459 = vcmp.ne.f32.partialorder %v455, %v455
    %v460 = vsel %vm456, 0.0, %v452
    %v461 = vsel %vm457, 0.0, %v453
    %v462 = vsel %vm458, 0.0, %v454
    %v463 = vsel %vm459, 0.0, %v455
    %vm464 = vcmp.lt.f32.partialorder %v460, 0.0
    %vm465 = vcmp.lt.f32.partialorder %v461, 0.0
    %vm466 = vcmp.lt.f32.partialorder %v462, 0.0
    %vm467 = vcmp.lt.f32.partialorder %v463, 0.0
    %v468 = vadd.f32 %v460, 1.0
    %v469 = vadd.f32 %v461, 1.0
    %v470 = vadd.f32 %v462, 1.0
    %v471 = vadd.f32 %v463, 1.0
    %v472 = vsel %vm464, %v468, %v460
    %v473 = vsel %vm465, %v469, %v461
    %v474 = vsel %vm466, %v470, %v462
    %v475 = vsel %vm467, %v471, %v463
    %476 = vst.msk [vmem:[#allocation5] sm:$0xff] %vm299, %v472
    %477 = vst.msk [vmem:[#allocation5 + $0x8] sm:$0xff] %vm299, %v473
    %478 = vst.msk [vmem:[#allocation5 + $0x10] sm:$0xff] %vm299, %v474
    %479 = vst.msk [vmem:[#allocation5 + $0x18] sm:$0xff] %vm299, %v475
    // Predicated region
    $region10: #{tpu_custom_call.1} parent=1 // pred_check
      _
    $region11: #{tpu_custom_call.1} parent=1 // pred_check_branch
      %481 = sbr.rel (0) target = $region13
    $region12: #{tpu_custom_call.1} parent=1 // pred_region
      %s483 = ssub.s32 512, 512
      %484 = vsyncadd [#allocation4], %s483
      %s485 = sshll.u32 [#allocation5], 4
      %s486 = int_to_ptr.vmem [resolvable:$true] %s485
      %491 = dma.vmem_to_hbm [thread:$0]  %s486, 512, %s1, [#allocation4], 128, 128, 8
    $region13: #{tpu_custom_call.1} parent=1 // pred_fallthru
      _
    // Predicated region
    $region14: #{tpu_custom_call.1} parent=1 // pred_check
      _
    $region15: #{tpu_custom_call.1} parent=1 // pred_check_branch
      %493 = sbr.rel (0) target = $region17
    $region16: #{tpu_custom_call.1} parent=1 // pred_region
      %494 = dma.done [#allocation4], 512
    $region17: #{tpu_custom_call.1} parent=1 // pred_fallthru
      _
    %495 = vsyncpa [#allocation3], 1
    %496 = vsyncpa [#allocation4], 1

</llo_original>
